<compile_context>
chip_gen: v5e
topology: v5e:2x2
jax: 0.10.0
libtpu: 0.0.40
codegen_flags: <defaults>
</compile_context>

<pallas_src>
import functools

import jax
import jax.numpy as jnp
from jax import lax
from jax.experimental import pallas as pl
from jax.experimental.pallas import tpu as pltpu


def _round_up(x, m):
    return (x + m - 1) // m * m


def _vmem_capacity_bytes():
    """Per-core physical VMEM; conservative fallback if the query fails."""
    try:
        info = pltpu.get_tpu_info()
        cap = getattr(info, "vmem_capacity_bytes", None)
        if cap:
            return int(cap)
    except Exception:
        pass
    return 64 * 1024 * 1024  # v7x has the smallest per-core VMEM (64 MiB)


def _auto_tile_n(n_rows, n_chan, itemsize, vmem_cap):
    # VMEM budget: double-buffered input block (lane-padded to 128) plus the
    # small double-buffered (8, tile_n) f32 output block, with headroom.
    usable = max(16 * 1024 * 1024, int(vmem_cap * 0.6) - 4 * 1024 * 1024)
    per_row = 2 * 128 * itemsize + 2 * 8 * 4
    budget_rows = usable // per_row
    # ~6 MiB of useful feature bytes per grid step -> multi-microsecond DMA,
    # amortizing the ~0.35 us fixed per-step overhead to <10% on v5e/v6e/v7x.
    target_rows = (6 * 1024 * 1024) // max(1, n_chan * itemsize)
    tile = min(budget_rows, target_rows, 65536)
    # Keep >= 2 grid steps so the "parallel" axis can shard across both v7x
    # TensorCores (harmless on single-core v5e/v6e).
    tile = min(tile, max(512, _round_up(pl.cdiv(n_rows, 2), 512)))
    tile = max(512, (tile // 512) * 512)
    tile = min(tile, max(8, _round_up(n_rows, 8)))
    return int(tile)


def _fea2density_kernel(w_ref, x_ref, o_ref, *, apply_linear_relu,
                        density_shift, fea2dense_act):
    # w_ref: (1, C)   x_ref: (tile_n, C)   o_ref: (1, tile_n)
    #
    # Contract over C with the feature tile as the transposed operand (the
    # q @ k^T pattern): (1, C) x (tile_n, C) -> (1, tile_n). The MXU result is
    # lane-dense along tile_n, so the activation math and the store below stay
    # on dense vregs and the writeback DMA is contiguous and unmasked.
    z = lax.dot_general(
        w_ref[...], x_ref[...],
        dimension_numbers=(((1,), (1,)), ((), ())),
        preferred_element_type=jnp.float32)
    if apply_linear_relu:
        z = jnp.maximum(z, 0.0)                        # nn.ReLU() after the Linear
    if fea2dense_act == "softplus":
        out = jax.nn.softplus(z + density_shift)
    elif fea2dense_act == "relu":
        out = jnp.maximum(z, 0.0)
    else:
        raise NotImplementedError(
            f"Unknown density activation function: {fea2dense_act}.")
    o_ref[...] = out.astype(o_ref.dtype)


def feature2density(sigma_feature, weight=None, *, nonlinear_density=True,
                    density_shift=-10.0, fea2dense_act="softplus", tile_n=None):
    """sigma_feature: (N, C) f32/bf16, weight: (C, 1) or (1, C) -> density: (N, 1) f32.

    Ragged N is handled with a cdiv grid (no input pad copy).
    """
    if fea2dense_act not in ("softplus", "relu"):
        raise NotImplementedError(
            f"Unknown density activation function: {fea2dense_act}.")

    N, C = sigma_feature.shape
    x_dtype = sigma_feature.dtype
    itemsize = jnp.dtype(x_dtype).itemsize

    if nonlinear_density:
        assert weight is not None and weight.size == C
        # Cast the (tiny) weight to the feature dtype; accumulation is f32 in-kernel.
        w_row = weight.reshape(1, C).astype(x_dtype)
    else:
        # Without the linear layer the feature itself must already be (N, 1);
        # a ones-weight contraction over C == 1 is the identity (no ReLU applied).
        assert C == 1, "nonlinear_density=False expects a (N, 1) feature"
        w_row = jnp.ones((1, 1), dtype=x_dtype)

    vmem_cap = _vmem_capacity_bytes()
    if tile_n is None:
        tile_n = _auto_tile_n(N, C, itemsize, vmem_cap)
    else:
        tile_n = max(8, _round_up(min(int(tile_n), max(8, _round_up(N, 8))), 8))
    grid_n = pl.cdiv(N, tile_n)

    # --- VMEM budget (double-buffered, lane/sublane-padded) & cost hint -------
    in_buf = tile_n * 128 * itemsize          # (tile_n, C<=128) lane-padded
    out_buf = 8 * tile_n * 4                  # (1, tile_n) f32 sublane-padded
    w_buf = 8 * 128 * itemsize
    vmem_est = 2 * (in_buf + out_buf) + 2 * w_buf + 64 * 1024
    vmem_limit = int(min(vmem_cap - 8 * 1024 * 1024,
                         max(32 * 1024 * 1024, vmem_est + 8 * 1024 * 1024)))

    cost = pl.CostEstimate(
        flops=2 * N * C if nonlinear_density else 0,
        transcendentals=2 * N if fea2dense_act == "softplus" else 0,
        bytes_accessed=itemsize * (N * C + C) + 4 * grid_n * tile_n,
    )

    kernel = functools.partial(
        _fea2density_kernel,
        apply_linear_relu=nonlinear_density,
        density_shift=density_shift,
        fea2dense_act=fea2dense_act,
    )

    out = pl.pallas_call(
        kernel,
        out_shape=jax.ShapeDtypeStruct((grid_n, 1, tile_n), jnp.float32),
        grid_spec=pltpu.PrefetchScalarGridSpec(
            num_scalar_prefetch=0,
            grid=(grid_n,),
            in_specs=[
                pl.BlockSpec((1, C), lambda i: (0, 0)),        # weight (resident)
                pl.BlockSpec((tile_n, C), lambda i: (i, 0)),   # feature row tile
            ],
            out_specs=pl.BlockSpec((None, 1, tile_n), lambda i: (i, 0, 0)),
        ),
        compiler_params=pltpu.CompilerParams(
            dimension_semantics=("parallel",),
            vmem_limit_bytes=vmem_limit,
        ),
        cost_estimate=cost,
    )(w_row, sigma_feature)

    # Lane-dense (grid, 1, tile_n) -> (N, 1). Rows >= N (computed from the
    # unspecified tail of the last partial input block) are sliced away here,
    # so never assert on the padded region.
    return out.reshape(grid_n * tile_n)[:N].reshape(N, 1)


def _reference(sigma_feature, weight, *, nonlinear_density, density_shift,
               fea2dense_act):
    z = sigma_feature
    if nonlinear_density:
        z = jnp.maximum(z @ weight, 0.0)
    if fea2dense_act == "softplus":
        return jax.nn.softplus(z + density_shift)
    return jnp.maximum(z, 0.0)


if __name__ == "__main__":
    # Module hyper-params (synthetic, deterministic, small).
    sum_n_component = 16
    resModeLen = 3
    C = sum_n_component * resModeLen          # 48 input feature channels
    N = 1000                                  # deliberately ragged sample count
    nonlinear_density = True
    density_shift = -10.0
    fea2dense_act = "softplus"

    key = jax.random.PRNGKey(0)
    k_x, k_w = jax.random.split(key)
    sigma_feature = jax.random.normal(k_x, (N, C), dtype=jnp.float32)
    # nn.Linear(C, 1, bias=False) weight, stored transposed as (C, 1).
    weight = jax.random.normal(k_w, (C, 1), dtype=jnp.float32) * (1.0 / jnp.sqrt(C))

    # --- f32 path -------------------------------------------------------------
    density = feature2density(
        sigma_feature, weight,
        nonlinear_density=nonlinear_density,
        density_shift=density_shift,
        fea2dense_act=fea2dense_act,
    )
    density = jax.block_until_ready(density)
    ref = _reference(
        sigma_feature, weight,
        nonlinear_density=nonlinear_density,
        density_shift=density_shift,
        fea2dense_act=fea2dense_act,
    )
    assert density.shape == (N, 1)
    assert jnp.allclose(density, ref, atol=1e-5, rtol=1e-5)

    # --- bf16 feature path (halves HBM traffic; f32 accumulate in-kernel) -----
    x_bf16 = sigma_feature.astype(jnp.bfloat16)
    density_bf16 = jax.block_until_ready(feature2density(
        x_bf16, weight,
        nonlinear_density=nonlinear_density,
        density_shift=density_shift,
        fea2dense_act=fea2dense_act,
    ))
    ref_bf16 = _reference(
        x_bf16.astype(jnp.float32),
        weight.astype(jnp.bfloat16).astype(jnp.float32),
        nonlinear_density=nonlinear_density,
        density_shift=density_shift,
        fea2dense_act=fea2dense_act,
    )
    assert density_bf16.shape == (N, 1)
    assert jnp.allclose(density_bf16, ref_bf16, rtol=2e-2, atol=1e-6)

    print("KERNEL_OK")
</pallas_src>

<mosaic_0001>
module attributes {stable_mosaic.version = 11 : i64} {
  func.func @_fea2density_kernel(%arg0: i32, %arg1: memref<1x48xf32, #tpu.memory_space<vmem>>, %arg2: memref<512x48xf32, #tpu.memory_space<vmem>>, %arg3: memref<1x1x512xf32, #tpu.memory_space<vmem>>) attributes {dimension_semantics = [#tpu.dimension_semantics<parallel>], iteration_bounds = array<i64: 2>, scalar_prefetch = 0 : i64, scratch_operands = 0 : i64, tpu.core_type = #tpu.core_type<tc>, window_params = [{pipeline_mode = #tpu.pipeline_mode<synchronous>, transform_indices = @transform_0, window_bounds = array<i64: 1, 48>}, {transform_indices = @transform_1, window_bounds = array<i64: 512, 48>}, {transform_indices = @transform_2, window_bounds = array<i64: 1, 1, 512>}]} {
    %c0 = arith.constant 0 : index
    %c0_0 = arith.constant 0 : index
    %0 = vector.load %arg1[%c0, %c0_0] : memref<1x48xf32, #tpu.memory_space<vmem>>, vector<1x48xf32>
    %c0_1 = arith.constant 0 : index
    %c0_2 = arith.constant 0 : index
    %1 = vector.load %arg2[%c0_1, %c0_2] : memref<512x48xf32, #tpu.memory_space<vmem>>, vector<512x48xf32>
    %cst = arith.constant dense<0.000000e+00> : vector<1x512xf32>
    %2 = tpu.matmul %0, %1, %cst {dimension_numbers = #tpu.dot_dimension_numbers<[1], [1], [0], [0], [0, 0, 1, 0], [], []>} : vector<1x48xf32>, vector<512x48xf32>, vector<1x512xf32> -> vector<1x512xf32>
    %cst_3 = arith.constant 0.000000e+00 : f32
    %3 = vector.broadcast %cst_3 : f32 to vector<1x512xf32>
    %4 = arith.maximumf %2, %3 : vector<1x512xf32>
    %cst_4 = arith.constant -1.000000e+01 : f32
    %5 = vector.broadcast %cst_4 : f32 to vector<1x512xf32>
    %6 = arith.addf %4, %5 : vector<1x512xf32>
    %cst_5 = arith.constant 0.000000e+00 : f32
    %7 = vector.broadcast %cst_5 : f32 to vector<1x512xf32>
    %8 = arith.maximumf %6, %7 : vector<1x512xf32>
    %9 = vector.broadcast %cst_5 : f32 to vector<1x512xf32>
    %10 = arith.subf %6, %9 : vector<1x512xf32>
    %11 = arith.cmpf one, %10, %10 : vector<1x512xf32>
    %12 = vector.broadcast %cst_5 : f32 to vector<1x512xf32>
    %13 = arith.addf %6, %12 : vector<1x512xf32>
    %14 = math.absf %10 : vector<1x512xf32>
    %cst_6 = arith.constant 0.000000e+00 : f32
    %15 = vector.broadcast %cst_6 : f32 to vector<1x512xf32>
    %16 = arith.subf %15, %14 : vector<1x512xf32>
    %17 = math.exp %16 : vector<1x512xf32>
    %18 = math.log1p %17 : vector<1x512xf32>
    %19 = arith.addf %8, %18 : vector<1x512xf32>
    %20 = arith.select %11, %13, %19 : vector<1x512xi1>, vector<1x512xf32>
    %c0_7 = arith.constant 0 : index
    %c0_8 = arith.constant 0 : index
    %c0_9 = arith.constant 0 : index
    %21 = vector.load %arg3[%c0_7, %c0_8, %c0_9] : memref<1x1x512xf32, #tpu.memory_space<vmem>>, vector<1x1x512xf32>
    %22 = vector.shape_cast %21 : vector<1x1x512xf32> to vector<1x512xf32>
    %23 = vector.shape_cast %20 : vector<1x512xf32> to vector<1x1x512xf32>
    tpu.vector_store %arg3[%c0_7, %c0_8, %c0_9], %23 {strides = array<i32>} : memref<1x1x512xf32, #tpu.memory_space<vmem>>, vector<1x1x512xf32>,
    return
  }
  func.func @transform_0(%arg0: i32) -> (i32, i32) {
    %c0_i32 = arith.constant 0 : i32
    %c0_i32_0 = arith.constant 0 : i32
    %c0_i32_1 = arith.constant 0 : i32
    return %c0_i32, %c0_i32_0 : i32, i32
  }
  func.func @transform_1(%arg0: i32) -> (i32, i32) {
    %c0_i32 = arith.constant 0 : i32
    %c0_i32_0 = arith.constant 0 : i32
    return %arg0, %c0_i32 : i32, i32
  }
  func.func @transform_2(%arg0: i32) -> (i32, i32, i32) {
    %c0_i32 = arith.constant 0 : i32
    %c0_i32_0 = arith.constant 0 : i32
    %c0_i32_1 = arith.constant 0 : i32
    return %arg0, %c0_i32, %c0_i32_0 : i32, i32, i32
  }
}

</mosaic_0001>

<llo_original>
// kernel: tpu_custom_call.1
$region0: #{tpu_custom_call.1}
  #allocation0 [shape = 'u32[]', space=smem, size = 0x4, offset = 0x4, fixed_abs, tag = 'smem constant byte address 0x4 - core index']
  #allocation1 [shape = 'u32[72,128]{1,0:T(1,128)}', space=vmem, size = 0x9000, scoped, tag = 'internal scratch']
  %s0 = inlined_call_operand.vmem [shape: f32[1,48], index: 0, kind: input, shape index: {}]
  %s1 = inlined_call_operand.vmem [shape: f32[1000,48], index: 1, kind: input, shape index: {}]
  %s2 = inlined_call_operand.hbm [shape: f32[2,1,512], index: 2, kind: output, shape index: {}]
  %s3 = sld [smem:[#allocation0]]
  $region41: #{tpu_custom_call.1} parent=0
    _
  %s5 = ssub.s32 1, %s3
  %s6 = scalar_select 0, %s5, %s3
  $region1: #{tpu_custom_call.1} parent=0
    #allocation2 [shape = 'u8[4096]{0}', space=vmem, size = 0x1000, scoped, tag = 'output window, operand 0']
    #allocation3 [shape = 's32[2]{0}', space=sflag, size = 0x8, scoped, tag = 'scoped memory for tpu_custom_call.1']
    %7 = vsyncpa [#allocation3], 0
    %s8 = scalar_lea.sflag [#allocation3], 1
    %9 = vsyncpa %s8, 0
    loop: start=0, step=1, limit=4
    $region2: #{tpu_custom_call.1} parent=1 // loop_pre_header
      _
    $region3: #{tpu_custom_call.1} parent=1 // loop_header
      %s11 = sphi 0, %s15
      %p12 = scmp.ge.s32.totalorder %s11, 4
      %s19 = sphi 0, %s19
      %s21 = sphi 0, %s19
      %s22 = sphi 0, %s21
      %s36 = sphi 0, %s22
      %s42 = sphi 0, %s44
      %s45 = sphi 0, %s42
      %s46 = sphi 0, %s45
      %s62 = sphi 0, %s46
      %s68 = sphi 0, %s70
      %s71 = sphi 0, %s68
      %s72 = sphi 0, %s71
      %s88 = sphi 0, %s72
    $region4: #{tpu_custom_call.1} parent=1 // loop_header_branch
      %14 = sbr.rel (%p12) target = $region8
    $region5: #{tpu_custom_call.1} parent=1 // loop_body
      %s16 = ssub.s32 %s11, 1
      %s17 = ssub.s32 %s11, 2
      %s18 = sadd.s32 %s11, 1
      %s20 = sadd.s32 %s19, 1
      %p23 = scmp.eq.s32.totalorder %s11, 1
      %p24 = scmp.ne.s32.totalorder %s19, %s21
      %p25 = scmp.eq.s32.totalorder %s11, 0
      %p26 = por %p24, %p25
      %p27 = scmp.ne.s32.totalorder %s19, %s21
      %p28 = scmp.eq.s32.totalorder %s16, 1
      %p29 = por %p27, %p28
      %p30 = scmp.ne.s32.totalorder %s21, %s22
      %p31 = scmp.eq.s32.totalorder %s16, 0
      %p32 = por %p30, %p31
      %p33 = scmp.ne.s32.totalorder %s21, %s22
      %p34 = scmp.eq.s32.totalorder %s17, 1
      %p35 = por %p33, %p34
      %p37 = scmp.ne.s32.totalorder %s22, %s36
      %p38 = scmp.eq.s32.totalorder %s17, 0
      %p39 = por %p37, %p38
      %s40 = ssub.s32 %s11, %s18
      %p41 = scmp.eq.s32.totalorder %s40, 0
      %s43 = sadd.s32 %s42, 1
      %s44 = scalar_select %p41, %s42, %s43
      %p47 = pneg %p41
      %p48 = scmp.eq.s32.totalorder %s11, 1
      %p49 = por %p47, %p48
      %p50 = scmp.ne.s32.totalorder %s42, %s45
      %p51 = scmp.eq.s32.totalorder %s11, 0
      %p52 = por %p50, %p51
      %p53 = scmp.ne.s32.totalorder %s42, %s45
      %p54 = scmp.eq.s32.totalorder %s16, 1
      %p55 = por %p53, %p54
      %p56 = scmp.ne.s32.totalorder %s45, %s46
      %p57 = scmp.eq.s32.totalorder %s16, 0
      %p58 = por %p56, %p57
      %p59 = scmp.ne.s32.totalorder %s45, %s46
      %p60 = scmp.eq.s32.totalorder %s17, 1
      %p61 = por %p59, %p60
      %p63 = scmp.ne.s32.totalorder %s46, %s62
      %p64 = scmp.eq.s32.totalorder %s17, 0
      %p65 = por %p63, %p64
      %s66 = ssub.s32 %s11, %s18
      %p67 = scmp.eq.s32.totalorder %s66, 0
      %s69 = sadd.s32 %s68, 1
      %s70 = scalar_select %p67, %s68, %s69
      %p73 = pneg %p67
      %p74 = scmp.eq.s32.totalorder %s11, 1
      %p75 = por %p73, %p74
      %p76 = scmp.ne.s32.totalorder %s68, %s71
      %p77 = scmp.eq.s32.totalorder %s11, 0
      %p78 = por %p76, %p77
      %p79 = scmp.ne.s32.totalorder %s68, %s71
      %p80 = scmp.eq.s32.totalorder %s16, 1
      %p81 = por %p79, %p80
      %p82 = scmp.ne.s32.totalorder %s71, %s72
      %p83 = scmp.eq.s32.totalorder %s16, 0
      %p84 = por %p82, %p83
      %p85 = scmp.ne.s32.totalorder %s71, %s72
      %p86 = scmp.eq.s32.totalorder %s17, 1
      %p87 = por %p85, %p86
      %p89 = scmp.ne.s32.totalorder %s72, %s88
      %p90 = scmp.eq.s32.totalorder %s17, 0
      %p91 = por %p89, %p90
      %p92 = scmp.le.s32.totalorder 1, %s11
      %p93 = scmp.lt.s32.totalorder %s11, 3
      %p94 = pnand %p92, %p93
      %p95 = pneg %p94
      // Predicated region
      $region9: #{tpu_custom_call.1} parent=5 // pred_check
        _
      $region10: #{tpu_custom_call.1} parent=5 // pred_check_branch
        %97 = sbr.rel (%p94) target = $region12
      $region11: #{tpu_custom_call.1} parent=5 // pred_region
        %s98 = ssub.s32 %s11, 1
        // Predicated region
        $region13: #{tpu_custom_call.1} parent=11 // pred_check
          %p99 = pneg %p32
        $region14: #{tpu_custom_call.1} parent=11 // pred_check_branch
          %101 = sbr.rel (%p99) target = $region16
        $region15: #{tpu_custom_call.1} parent=11 // pred_region
          _
        $region16: #{tpu_custom_call.1} parent=11 // pred_fallthru
          _
      $region12: #{tpu_custom_call.1} parent=5 // pred_fallthru
        _
      %p102 = scmp.lt.s32.totalorder %s11, 2
      // Predicated region
      $region17: #{tpu_custom_call.1} parent=5 // pred_check
        %p103 = pneg %p102
      $region18: #{tpu_custom_call.1} parent=5 // pred_check_branch
        %105 = sbr.rel (%p103) target = $region20
      $region19: #{tpu_custom_call.1} parent=5 // pred_region
        // Predicated region
        $region21: #{tpu_custom_call.1} parent=19 // pred_check
          %p106 = pneg %p52
        $region22: #{tpu_custom_call.1} parent=19 // pred_check_branch
          %108 = sbr.rel (%p106) target = $region24
        $region23: #{tpu_custom_call.1} parent=19 // pred_region
          %s109 = smul.u32 64, %s11
          %s110 = ssub.s32 125, %s109
          %p111 = scmp.lt.s32.totalorder %s110, 64
          %s112 = scalar_select %p111, %s110, 64
          %s113 = smul.u32 8, %s112
          %p114 = scmp.lt.s32.totalorder %s109, 124
          %s115 = scalar_select %p114, %s109, 124
          %s116 = smul.addr %s115, 8
          %s117 = scalar_lea.vmem %s1, %s116
          %s118 = smul.u32 64, %s11
          %s119 = ssub.s32 125, %s118
          %p120 = scmp.lt.s32.totalorder %s119, 64
          %s121 = scalar_select %p120, %s119, 64
          %s122 = smul.u32 8, %s121
        $region24: #{tpu_custom_call.1} parent=19 // pred_fallthru
          _
      $region20: #{tpu_custom_call.1} parent=5 // pred_fallthru
        _
      %p123 = scmp.le.s32.totalorder 1, %s11
      %p124 = scmp.lt.s32.totalorder %s11, 3
      %p125 = pnand %p123, %p124
      %p126 = pneg %p125
      // Predicated region
      $region25: #{tpu_custom_call.1} parent=5 // pred_check
        _
      $region26: #{tpu_custom_call.1} parent=5 // pred_check_branch
        %128 = sbr.rel (%p125) target = $region28
      $region27: #{tpu_custom_call.1} parent=5 // pred_region
        %s129 = ssub.s32 %s11, 1
        %p130 = pneg %p32
        %p131 = pneg %p29
        %s132 = smul.u32 64, %s16
        %s133 = ssub.s32 125, %s132
        %p134 = scmp.lt.s32.totalorder %s133, 64
        %s135 = scalar_select %p134, %s133, 64
        %s136 = smul.u32 8, %s135
        %p137 = scmp.lt.s32.totalorder %s132, 124
        %s138 = scalar_select %p137, %s132, 124
        %s139 = smul.addr %s138, 8
        %s140 = scalar_lea.vmem %s1, %s139
        %p141 = pneg %p58
        %p142 = pneg %p55
        %p143 = pneg %p84
        %p144 = pneg %p81
        %s145 = sand.u32 %s71, 1
        %s146 = scalar_lea.sflag [#allocation3], %s145
        %s147 = sand.u32 %s71, 1
        %s148 = smul.addr %s147, 4
        %s149 = scalar_lea.vmem [#allocation2], %s148
        %s150 = smul.u32 64, %s16
        %s151 = ssub.s32 125, %s150
        %p152 = scmp.lt.s32.totalorder %s151, 64
        %s153 = scalar_select %p152, %s151, 64
        %s154 = smul.u32 8, %s153
        %p155 = scmp.lt.s32.totalorder %s150, 124
        %s156 = scalar_select %p155, %s150, 124
        %s157 = smul.addr %s156, 8
        %s158 = scalar_lea.vmem %s1, %s157
        %s159 = smul.u32 64, %s16
        %s160 = ssub.s32 125, %s159
        %p161 = scmp.lt.s32.totalorder %s160, 64
        %s162 = scalar_select %p161, %s160, 64
        %s163 = smul.u32 8, %s162
        %v164 = vld [vmem:[%s0] sm:$0x1]
        %v165 = vld [vmem:[%s158] sm:$0xff]
        %v166 = vld [vmem:[%s158 + $0x8] sm:$0xff]
        %v167 = vld [vmem:[%s158 + $0x10] sm:$0xff]
        %v168 = vld [vmem:[%s158 + $0x18] sm:$0xff]
        %v169 = vld [vmem:[%s158 + $0x20] sm:$0xff]
        %v170 = vld [vmem:[%s158 + $0x28] sm:$0xff]
        %v171 = vld [vmem:[%s158 + $0x30] sm:$0xff]
        %v172 = vld [vmem:[%s158 + $0x38] sm:$0xff]
        %v173 = vld [vmem:[%s158 + $0x40] sm:$0xff]
        %v174 = vld [vmem:[%s158 + $0x48] sm:$0xff]
        %v175 = vld [vmem:[%s158 + $0x50] sm:$0xff]
        %v176 = vld [vmem:[%s158 + $0x58] sm:$0xff]
        %v177 = vld [vmem:[%s158 + $0x60] sm:$0xff]
        %v178 = vld [vmem:[%s158 + $0x68] sm:$0xff]
        %v179 = vld [vmem:[%s158 + $0x70] sm:$0xff]
        %v180 = vld [vmem:[%s158 + $0x78] sm:$0xff]
        %v181 = vld [vmem:[%s158 + $0x80] sm:$0xff]
        %v182 = vld [vmem:[%s158 + $0x88] sm:$0xff]
        %v183 = vld [vmem:[%s158 + $0x90] sm:$0xff]
        %v184 = vld [vmem:[%s158 + $0x98] sm:$0xff]
        %v185 = vld [vmem:[%s158 + $0xa0] sm:$0xff]
        %v186 = vld [vmem:[%s158 + $0xa8] sm:$0xff]
        %v187 = vld [vmem:[%s158 + $0xb0] sm:$0xff]
        %v188 = vld [vmem:[%s158 + $0xb8] sm:$0xff]
        %v189 = vld [vmem:[%s158 + $0xc0] sm:$0xff]
        %v190 = vld [vmem:[%s158 + $0xc8] sm:$0xff]
        %v191 = vld [vmem:[%s158 + $0xd0] sm:$0xff]
        %v192 = vld [vmem:[%s158 + $0xd8] sm:$0xff]
        %v193 = vld [vmem:[%s158 + $0xe0] sm:$0xff]
        %v194 = vld [vmem:[%s158 + $0xe8] sm:$0xff]
        %v195 = vld [vmem:[%s158 + $0xf0] sm:$0xff]
        %v196 = vld [vmem:[%s158 + $0xf8] sm:$0xff]
        %v197 = vld [vmem:[%s158 + $0x100] sm:$0xff]
        %v198 = vld [vmem:[%s158 + $0x108] sm:$0xff]
        %v199 = vld [vmem:[%s158 + $0x110] sm:$0xff]
        %v200 = vld [vmem:[%s158 + $0x118] sm:$0xff]
        %v201 = vld [vmem:[%s158 + $0x120] sm:$0xff]
        %v202 = vld [vmem:[%s158 + $0x128] sm:$0xff]
        %v203 = vld [vmem:[%s158 + $0x130] sm:$0xff]
        %v204 = vld [vmem:[%s158 + $0x138] sm:$0xff]
        %v205 = vld [vmem:[%s158 + $0x140] sm:$0xff]
        %v206 = vld [vmem:[%s158 + $0x148] sm:$0xff]
        %v207 = vld [vmem:[%s158 + $0x150] sm:$0xff]
        %v208 = vld [vmem:[%s158 + $0x158] sm:$0xff]
        %v209 = vld [vmem:[%s158 + $0x160] sm:$0xff]
        %v210 = vld [vmem:[%s158 + $0x168] sm:$0xff]
        %v211 = vld [vmem:[%s158 + $0x170] sm:$0xff]
        %v212 = vld [vmem:[%s158 + $0x178] sm:$0xff]
        %v213 = vld [vmem:[%s158 + $0x180] sm:$0xff]
        %v214 = vld [vmem:[%s158 + $0x188] sm:$0xff]
        %v215 = vld [vmem:[%s158 + $0x190] sm:$0xff]
        %v216 = vld [vmem:[%s158 + $0x198] sm:$0xff]
        %v217 = vld [vmem:[%s158 + $0x1a0] sm:$0xff]
        %v218 = vld [vmem:[%s158 + $0x1a8] sm:$0xff]
        %v219 = vld [vmem:[%s158 + $0x1b0] sm:$0xff]
        %v220 = vld [vmem:[%s158 + $0x1b8] sm:$0xff]
        %v221 = vld [vmem:[%s158 + $0x1c0] sm:$0xff]
        %v222 = vld [vmem:[%s158 + $0x1c8] sm:$0xff]
        %v223 = vld [vmem:[%s158 + $0x1d0] sm:$0xff]
        %v224 = vld [vmem:[%s158 + $0x1d8] sm:$0xff]
        %v225 = vld [vmem:[%s158 + $0x1e0] sm:$0xff]
        %v226 = vld [vmem:[%s158 + $0x1e8] sm:$0xff]
        %v227 = vld [vmem:[%s158 + $0x1f0] sm:$0xff]
        %v228 = vld [vmem:[%s158 + $0x1f8] sm:$0xff]
        %vm229 = vcmask 392192
        %v231 = vsel %vm229, %v164, 0
        %v234 = vsel %vm229, %v165, 0
        %v237 = vsel %vm229, %v166, 0
        %v240 = vsel %vm229, %v167, 0
        %v243 = vsel %vm229, %v168, 0
        %v246 = vsel %vm229, %v169, 0
        %v249 = vsel %vm229, %v170, 0
        %v252 = vsel %vm229, %v171, 0
        %v255 = vsel %vm229, %v172, 0
        %v258 = vsel %vm229, %v173, 0
        %v261 = vsel %vm229, %v174, 0
        %v264 = vsel %vm229, %v175, 0
        %v267 = vsel %vm229, %v176, 0
        %v270 = vsel %vm229, %v177, 0
        %v273 = vsel %vm229, %v178, 0
        %v276 = vsel %vm229, %v179, 0
        %v279 = vsel %vm229, %v180, 0
        %v282 = vsel %vm229, %v181, 0
        %v285 = vsel %vm229, %v182, 0
        %v288 = vsel %vm229, %v183, 0
        %v291 = vsel %vm229, %v184, 0
        %v294 = vsel %vm229, %v185, 0
        %v297 = vsel %vm229, %v186, 0
        %v300 = vsel %vm229, %v187, 0
        %v303 = vsel %vm229, %v188, 0
        %v306 = vsel %vm229, %v189, 0
        %v309 = vsel %vm229, %v190, 0
        %v312 = vsel %vm229, %v191, 0
        %v315 = vsel %vm229, %v192, 0
        %v318 = vsel %vm229, %v193, 0
        %v321 = vsel %vm229, %v194, 0
        %v324 = vsel %vm229, %v195, 0
        %v327 = vsel %vm229, %v196, 0
        %v330 = vsel %vm229, %v197, 0
        %v333 = vsel %vm229, %v198, 0
        %v336 = vsel %vm229, %v199, 0
        %v339 = vsel %vm229, %v200, 0
        %v342 = vsel %vm229, %v201, 0
        %v345 = vsel %vm229, %v202, 0
        %v348 = vsel %vm229, %v203, 0
        %v351 = vsel %vm229, %v204, 0
        %v354 = vsel %vm229, %v205, 0
        %v357 = vsel %vm229, %v206, 0
        %v360 = vsel %vm229, %v207, 0
        %v363 = vsel %vm229, %v208, 0
        %v366 = vsel %vm229, %v209, 0
        %v369 = vsel %vm229, %v210, 0
        %v372 = vsel %vm229, %v211, 0
        %v375 = vsel %vm229, %v212, 0
        %v378 = vsel %vm229, %v213, 0
        %v381 = vsel %vm229, %v214, 0
        %v384 = vsel %vm229, %v215, 0
        %v387 = vsel %vm229, %v216, 0
        %v390 = vsel %vm229, %v217, 0
        %v393 = vsel %vm229, %v218, 0
        %v396 = vsel %vm229, %v219, 0
        %v399 = vsel %vm229, %v220, 0
        %v402 = vsel %vm229, %v221, 0
        %v405 = vsel %vm229, %v222, 0
        %v408 = vsel %vm229, %v223, 0
        %v411 = vsel %vm229, %v224, 0
        %v414 = vsel %vm229, %v225, 0
        %v417 = vsel %vm229, %v226, 0
        %v420 = vsel %vm229, %v227, 0
        %v423 = vsel %vm229, %v228, 0
        %425 = vmatpush.xpose.msra.mxu0 %v279
        %426 = vmatpush.xpose.msra.mxu0 %v276
        %427 = vmatpush.xpose.msra.mxu0 %v273
        %428 = vmatpush.xpose.msra.mxu0 %v270
        %429 = vmatpush.xpose.msra.mxu0 %v267
        %430 = vmatpush.xpose.msra.mxu0 %v264
        %431 = vmatpush.xpose.msra.mxu0 %v261
        %432 = vmatpush.xpose.msra.mxu0 %v258
        %433 = vmatpush.xpose.msra.mxu0 %v255
        %434 = vmatpush.xpose.msra.mxu0 %v252
        %435 = vmatpush.xpose.msra.mxu0 %v249
        %436 = vmatpush.xpose.msra.mxu0 %v246
        %437 = vmatpush.xpose.msra.mxu0 %v243
        %438 = vmatpush.xpose.msra.mxu0 %v240
        %439 = vmatpush.xpose.msra.mxu0 %v237
        %440 = vmatpush.xpose.msra.mxu0 %v234
        %441 = vmatmul.f32.gmra.mxu0 %v231
        %v442 = vpop.f32.mrf.mxu0
        %v443 = vadd.f32 0.0, %v442
        %444 = vdwg.mxu0
        %445 = vmatpush.xpose.msra.mxu0 %v327
        %446 = vmatpush.xpose.msra.mxu0 %v324
        %447 = vmatpush.xpose.msra.mxu0 %v321
        %448 = vmatpush.xpose.msra.mxu0 %v318
        %449 = vmatpush.xpose.msra.mxu0 %v315
        %450 = vmatpush.xpose.msra.mxu0 %v312
        %451 = vmatpush.xpose.msra.mxu0 %v309
        %452 = vmatpush.xpose.msra.mxu0 %v306
        %453 = vmatpush.xpose.msra.mxu0 %v303
        %454 = vmatpush.xpose.msra.mxu0 %v300
        %455 = vmatpush.xpose.msra.mxu0 %v297
        %456 = vmatpush.xpose.msra.mxu0 %v294
        %457 = vmatpush.xpose.msra.mxu0 %v291
        %458 = vmatpush.xpose.msra.mxu0 %v288
        %459 = vmatpush.xpose.msra.mxu0 %v285
        %460 = vmatpush.xpose.msra.mxu0 %v282
        %461 = vmatmul.f32.gmra.mxu0 %v231
        %v462 = vpop.f32.mrf.mxu0
        %v463 = vadd.f32 0.0, %v462
        %464 = vdwg.mxu0
        %465 = vmatpush.xpose.msra.mxu0 %v375
        %466 = vmatpush.xpose.msra.mxu0 %v372
        %467 = vmatpush.xpose.msra.mxu0 %v369
        %468 = vmatpush.xpose.msra.mxu0 %v366
        %469 = vmatpush.xpose.msra.mxu0 %v363
        %470 = vmatpush.xpose.msra.mxu0 %v360
        %471 = vmatpush.xpose.msra.mxu0 %v357
        %472 = vmatpush.xpose.msra.mxu0 %v354
        %473 = vmatpush.xpose.msra.mxu0 %v351
        %474 = vmatpush.xpose.msra.mxu0 %v348
        %475 = vmatpush.xpose.msra.mxu0 %v345
        %476 = vmatpush.xpose.msra.mxu0 %v342
        %477 = vmatpush.xpose.msra.mxu0 %v339
        %478 = vmatpush.xpose.msra.mxu0 %v336
        %479 = vmatpush.xpose.msra.mxu0 %v333
        %480 = vmatpush.xpose.msra.mxu0 %v330
        %481 = vmatmul.f32.gmra.mxu0 %v231
        %v482 = vpop.f32.mrf.mxu0
        %v483 = vadd.f32 0.0, %v482
        %484 = vdwg.mxu0
        %485 = vmatpush.xpose.msra.mxu0 %v423
        %486 = vmatpush.xpose.msra.mxu0 %v420
        %487 = vmatpush.xpose.msra.mxu0 %v417
        %488 = vmatpush.xpose.msra.mxu0 %v414
        %489 = vmatpush.xpose.msra.mxu0 %v411
        %490 = vmatpush.xpose.msra.mxu0 %v408
        %491 = vmatpush.xpose.msra.mxu0 %v405
        %492 = vmatpush.xpose.msra.mxu0 %v402
        %493 = vmatpush.xpose.msra.mxu0 %v399
        %494 = vmatpush.xpose.msra.mxu0 %v396
        %495 = vmatpush.xpose.msra.mxu0 %v393
        %496 = vmatpush.xpose.msra.mxu0 %v390
        %497 = vmatpush.xpose.msra.mxu0 %v387
        %498 = vmatpush.xpose.msra.mxu0 %v384
        %499 = vmatpush.xpose.msra.mxu0 %v381
        %500 = vmatpush.xpose.msra.mxu0 %v378
        %501 = vmatmul.f32.gmra.mxu0 %v231
        %v502 = vpop.f32.mrf.mxu0
        %v503 = vadd.f32 0.0, %v502
        %504 = vdwg.mxu0
        %v505 = vmax.f32 %v443, 0.0
        %v506 = vmax.f32 %v463, 0.0
        %v507 = vmax.f32 %v483, 0.0
        %v508 = vmax.f32 %v503, 0.0
        %v509 = vadd.f32 %v505, -10.0
        %v510 = vadd.f32 %v506, -10.0
        %v511 = vadd.f32 %v507, -10.0
        %v512 = vadd.f32 %v508, -10.0
        %v513 = vmax.f32 %v509, 0.0
        %v514 = vmax.f32 %v510, 0.0
        %v515 = vmax.f32 %v511, 0.0
        %v516 = vmax.f32 %v512, 0.0
        %vm517 = vcmp.ne.f32.partialorder %v509, %v509
        %vm518 = vcmp.ne.f32.partialorder %v510, %v510
        %vm519 = vcmp.ne.f32.partialorder %v511, %v511
        %vm520 = vcmp.ne.f32.partialorder %v512, %v512
        %v521 = vadd.f32 %v509, 0.0
        %v522 = vadd.f32 %v510, 0.0
        %v523 = vadd.f32 %v511, 0.0
        %v524 = vadd.f32 %v512, 0.0
        %v525 = vand.u32 2147483647, %v509
        %v526 = vand.u32 2147483647, %v510
        %v527 = vand.u32 2147483647, %v511
        %v528 = vand.u32 2147483647, %v512
        %v529 = vsub.f32 0.0, %v525
        %v530 = vsub.f32 0.0, %v526
        %v531 = vsub.f32 0.0, %v527
        %v532 = vsub.f32 0.0, %v528
        %v533 = vmul.f32 %v529, 1.442695
        %v534 = vpow.pop %v533
        %v535 = vmul.f32 %v530, 1.442695
        %v536 = vpow.pop %v535
        %v537 = vmul.f32 %v531, 1.442695
        %v538 = vpow.pop %v537
        %v539 = vmul.f32 %v532, 1.442695
        %v540 = vpow.pop %v539
        %v541 = vadd.f32 %v534, 1.0
        %v542 = vlog2.pop %v541
        %v543 = vmul.f32 %v542, 0.6931472
        %v544 = vmul.f32 -0.5, %v534
        %v545 = vadd.f32 %v544, 1.0
        %v546 = vmul.f32 %v545, %v534
        %v547 = vand.u32 2147483647, %v534
        %vm548 = vcmp.lt.f32.partialorder %v547, 0.0004427343
        %v549 = vsel %vm548, %v546, %v543
        %v550 = vadd.f32 %v536, 1.0
        %v551 = vlog2.pop %v550
        %v552 = vmul.f32 %v551, 0.6931472
        %v553 = vmul.f32 -0.5, %v536
        %v554 = vadd.f32 %v553, 1.0
        %v555 = vmul.f32 %v554, %v536
        %v556 = vand.u32 2147483647, %v536
        %vm557 = vcmp.lt.f32.partialorder %v556, 0.0004427343
        %v558 = vsel %vm557, %v555, %v552
        %v559 = vadd.f32 %v538, 1.0
        %v560 = vlog2.pop %v559
        %v561 = vmul.f32 %v560, 0.6931472
        %v562 = vmul.f32 -0.5, %v538
        %v563 = vadd.f32 %v562, 1.0
        %v564 = vmul.f32 %v563, %v538
        %v565 = vand.u32 2147483647, %v538
        %vm566 = vcmp.lt.f32.partialorder %v565, 0.0004427343
        %v567 = vsel %vm566, %v564, %v561
        %v568 = vadd.f32 %v540, 1.0
        %v569 = vlog2.pop %v568
        %v570 = vmul.f32 %v569, 0.6931472
        %v571 = vmul.f32 -0.5, %v540
        %v572 = vadd.f32 %v571, 1.0
        %v573 = vmul.f32 %v572, %v540
        %v574 = vand.u32 2147483647, %v540
        %vm575 = vcmp.lt.f32.partialorder %v574, 0.0004427343
        %v576 = vsel %vm575, %v573, %v570
        %v577 = vadd.f32 %v513, %v549
        %v578 = vadd.f32 %v514, %v558
        %v579 = vadd.f32 %v515, %v567
        %v580 = vadd.f32 %v516, %v576
        %v581 = vsel %vm517, %v521, %v577
        %v582 = vsel %vm518, %v522, %v578
        %v583 = vsel %vm519, %v523, %v579
        %v584 = vsel %vm520, %v524, %v580
        %v589 = vrot.slane %v582, 7
        %v590 = vrot.slane %v583, 6
        %v591 = vrot.slane %v584, 5
        %vm592 = vcmask 1040384
        %v593 = vsel %vm592, %v581, %v589
        %vm594 = vcmask 1042434
        %v595 = vsel %vm594, %v590, %v591
        %vm596 = vcmask 1041408
        %v597 = vsel %vm596, %v593, %v595
        %v599 = vlaneseq
        %vm600 = vcmp.ge.s32.totalorder %v599, 0
        %vm601 = vcmp.lt.s32.totalorder %v599, 512
        %vm602 = vmand %vm600, %vm601
        %603 = vst.msk [vmem:[%s149] sm:$0xf] %vm602, %v597
        %s604 = sand.u32 %s71, 1
        %s605 = scalar_lea.sflag [#allocation3], %s604
        %s606 = sand.u32 %s71, 1
        %s607 = smul.addr %s606, 4
        %s608 = scalar_lea.vmem [#allocation2], %s607
        // Predicated region
        $region29: #{tpu_custom_call.1} parent=27 // pred_check
          %p609 = pneg %p81
        $region30: #{tpu_custom_call.1} parent=27 // pred_check_branch
          %611 = sbr.rel (%p609) target = $region32
        $region31: #{tpu_custom_call.1} parent=27 // pred_region
          %613 = vsyncadd %s605, 0
          %s614 = smul.addr %s16, 4
          %s615 = scalar_lea.hbm %s2, %s614
          %s617 = sshll.u32 %s608, 4
          %s618 = int_to_ptr.vmem [resolvable:$true] %s617
          %s619 = sshll.u32 %s615, 4
          %s620 = int_to_ptr.hbm [resolvable:$true] %s619
          %622 = dma.vmem_to_hbm [thread:$0]  %s618, 64, %s620, %s605
        $region32: #{tpu_custom_call.1} parent=27 // pred_fallthru
          _
      $region28: #{tpu_custom_call.1} parent=5 // pred_fallthru
        _
      %p623 = scmp.le.s32.totalorder 2, %s11
      // Predicated region
      $region33: #{tpu_custom_call.1} parent=5 // pred_check
        %p624 = pneg %p623
      $region34: #{tpu_custom_call.1} parent=5 // pred_check_branch
        %626 = sbr.rel (%p624) target = $region36
      $region35: #{tpu_custom_call.1} parent=5 // pred_region
        %s627 = ssub.s32 %s11, 2
        // Predicated region
        $region37: #{tpu_custom_call.1} parent=35 // pred_check
          %p628 = pneg %p87
        $region38: #{tpu_custom_call.1} parent=35 // pred_check_branch
          %630 = sbr.rel (%p628) target = $region40
        $region39: #{tpu_custom_call.1} parent=35 // pred_region
          %s631 = sand.u32 %s72, 1
          %s632 = scalar_lea.sflag [#allocation3], %s631
          %s633 = sand.u32 %s72, 1
          %s634 = smul.addr %s633, 4
          %s635 = scalar_lea.vmem [#allocation2], %s634
          %637 = dma.done %s632, 64
        $region40: #{tpu_custom_call.1} parent=35 // pred_fallthru
          _
      $region36: #{tpu_custom_call.1} parent=5 // pred_fallthru
        _
    $region6: #{tpu_custom_call.1} parent=1 // loop_footer
      %s15 = sadd.s32 1, %s11
    $region7: #{tpu_custom_call.1} parent=1 // loop_footer_branch
      %10 = sbr.rel target = $region3
    $region8: #{tpu_custom_call.1} parent=1 // loop_exit
      _
    %638 = vsyncpa [#allocation3], 1
    %s639 = scalar_lea.sflag [#allocation3], 1
    %640 = vsyncpa %s639, 1

</llo_original>
